<compile_context>
chip_gen: v5e
topology: v5e:2x2
jax: 0.10.0
libtpu: 0.0.40
codegen_flags: <defaults>
</compile_context>

<pallas_src>
import functools

import jax
import jax.numpy as jnp
from jax import lax
from jax.experimental import pallas as pl
from jax.experimental.pallas import tpu as pltpu


def _round_up(x, m):
    return (x + m - 1) // m * m


def _sampler_kernel(p_ref, g_ref, ids_ref, *, num_samples):
    """Without-replacement multinomial sampling via Gumbel-top-k.

    p_ref   : (BB, Kp) f32  probabilities (lane/row padding is don't-care; padded
                            lanes hold 0.0 so their keys become -inf)
    g_ref   : (BB, Kp) f32  Gumbel(0,1) noise
    ids_ref : (BB, Sp) i32  selected cluster indices, lane-padded to Sp >= 128

    Rows are processed in 8-sublane chunks so only a handful of vregs are live
    (keys chunk + id accumulator + iotas) instead of the whole tile.
    """
    BB, Kp = p_ref.shape
    Sp = ids_ref.shape[-1]
    n_chunks = BB // 8

    # Chunk-invariant iotas, hoisted out of both loops (JAX does not CSE these).
    col = lax.broadcasted_iota(jnp.int32, (8, Kp), 1)       # lane index within K
    out_col = lax.broadcasted_iota(jnp.int32, (8, Sp), 1)   # lane index within output

    @pl.loop(0, n_chunks)
    def _chunk(c):
        r = pl.multiple_of(c * 8, 8)
        p = p_ref[pl.ds(r, 8), :]
        g = g_ref[pl.ds(r, 8), :]
        # Perturbed log-probabilities (log -> EUP, a free VLIW slot).
        # Zero / padded lanes get -inf keys and can never be selected.
        keys0 = jnp.where(p > 0.0, jnp.log(p), -jnp.inf) + g            # (8, Kp)

        def draw(s, carry):
            keys, ids = carry
            # Row-wise argmax with lowest-index tie break (max + min-of-match).
            # TODO(synk): a single jnp.argmax would halve the XLU reduces, but
            # its Pallas TPU lowering is not guaranteed in this sandbox, so the
            # known-good two-reduce form is kept.
            m = jnp.max(keys, axis=-1, keepdims=True)                   # (8, 1)
            idx = jnp.min(jnp.where(keys == m, col, Kp),
                          axis=-1, keepdims=True)                       # (8, 1) i32
            idx = jnp.minimum(idx, Kp - 1)     # guard all-NaN / exhausted rows
            ids = jnp.where(out_col == s, idx, ids)                     # col s := idx
            keys = jnp.where(col == idx, -jnp.inf, keys)                # knockout
            return keys, ids

        # TODO(synk): rows with fewer than num_samples strictly-positive probs
        # degenerate to repeated index 0 once exhausted (torch would error).
        _, ids = lax.fori_loop(
            0, num_samples, draw,
            (keys0, jnp.zeros((8, Sp), jnp.int32)),
            unroll=(num_samples <= 16))

        ids_ref[pl.ds(r, 8), :] = ids          # one lane-dense store per chunk


def sampler_leneg(out_TF, clusters, num_samples, seed=0):
    """Pallas equivalent of Sampler_LeNeg.forward(bool=True).

    Returns (positions, zs, clusters_id):
      positions   : (B, num_samples, D)  -- the torch return value
      zs          : (num_samples, B)     -- the torch `self.zs`
      clusters_id : (B, num_samples)     -- the torch `self.clusters_id`
    """
    B, K = out_TF.shape
    Kc, D = clusters.shape
    assert Kc == K and num_samples <= K

    p = jnp.asarray(out_TF, jnp.float32)
    clusters = jnp.asarray(clusters, jnp.float32)

    # Gumbel noise from the host-side key.  Pass a fresh seed per call to mimic
    # torch's evolving global RNG state.
    # TODO(synk): drawing the noise with pltpu.prng_seed/prng_random_bits inside
    # the kernel would remove this HBM array, but that path has no lowering in
    # this sandbox, so the noise is generated in the wrapper and fused in-kernel.
    g = jax.random.gumbel(jax.random.PRNGKey(seed), (B, K), dtype=jnp.float32)

    # Lane-align K only when needed; zero-padded p lanes -> -inf keys in-kernel.
    Kp = _round_up(K, 128)
    if Kp != K:
        p_in = jnp.pad(p, ((0, 0), (0, Kp - K)))
        g_in = jnp.pad(g, ((0, 0), (0, Kp - K)))
    else:
        p_in, g_in = p, g

    # Batch tiling: sublane-aligned; >=2 grid programs when B > 8 so v7x can use
    # both TensorCores; rows capped so double-buffered (p, g) tiles stay well
    # under v5e's 16 MiB default scoped-VMEM limit.  No batch padding: the
    # ragged last block reads don't-care rows whose outputs are sliced away.
    if B <= 8:
        block_b = 8
    else:
        block_b = min(256, _round_up(pl.cdiv(B, 2), 8))
        vmem_cap_rows = (max(8, (8 * 1024 * 1024) // (16 * Kp)) // 8) * 8
        block_b = max(8, min(block_b, vmem_cap_rows))
    n_blocks = pl.cdiv(B, block_b)
    Spad = _round_up(max(num_samples, 128), 128)   # lane-dense int32 output slab

    kernel = functools.partial(_sampler_kernel, num_samples=num_samples)
    ids_full = pl.pallas_call(
        kernel,
        grid=(n_blocks,),
        in_specs=[pl.BlockSpec((block_b, Kp), lambda i: (i, 0)),
                  pl.BlockSpec((block_b, Kp), lambda i: (i, 0))],
        out_specs=pl.BlockSpec((block_b, Spad), lambda i: (i, 0)),
        out_shape=jax.ShapeDtypeStruct((n_blocks * block_b, Spad), jnp.int32),
        compiler_params=pltpu.CompilerParams(
            dimension_semantics=("parallel",)),
    )(p_in, g_in)

    ids = ids_full[:B, :num_samples]                        # (B, S)

    # Cheap gathers stay outside the kernel.
    zs = jnp.take_along_axis(p, ids, axis=1).T              # (S, B)    == torch zs
    positions = jnp.take(clusters, ids, axis=0)             # (B, S, D) == torch return
    return positions, zs, ids


def _check_case(out_TF, clusters, num_samples, seed):
    B, K = out_TF.shape
    D = clusters.shape[1]
    positions, zs, ids = sampler_leneg(out_TF, clusters, num_samples, seed=seed)
    jax.block_until_ready((positions, zs, ids))

    assert positions.shape == (B, num_samples, D)
    assert zs.shape == (num_samples, B)
    assert ids.shape == (B, num_samples)
    ids_np = jax.device_get(ids)
    zs_np = jax.device_get(zs)
    pos_np = jax.device_get(positions)
    p_np = jax.device_get(out_TF)
    c_np = jax.device_get(clusters)
    for b in range(B):
        row_ids = ids_np[b].tolist()
        assert len(set(row_ids)) == num_samples              # without replacement
        assert all(0 <= i < K for i in row_ids)              # valid cluster ids
        assert jnp.allclose(zs_np[:, b], p_np[b, ids_np[b]], atol=1e-6)
        assert jnp.allclose(pos_np[b], c_np[ids_np[b]], atol=1e-6)


if __name__ == "__main__":
    key = jax.random.PRNGKey(0)
    k1, k2, k3, k4 = jax.random.split(key, 4)

    # Case 1: small, lane-aligned (1000-dim torch output shrunk to K=256).
    B, K, D, S = 4, 256, 2, 8
    out_TF = jax.nn.softmax(jax.random.normal(k1, (B, K), dtype=jnp.float32), axis=-1)
    clusters = jax.random.normal(k2, (K, D), dtype=jnp.float32)
    _check_case(out_TF, clusters, S, seed=1234)

    # Case 2: ragged K (not a multiple of 128) and ragged batch.
    B2, K2, D2, S2 = 3, 200, 3, 5
    out_TF2 = jax.nn.softmax(jax.random.normal(k3, (B2, K2), dtype=jnp.float32), axis=-1)
    clusters2 = jax.random.normal(k4, (K2, D2), dtype=jnp.float32)
    _check_case(out_TF2, clusters2, S2, seed=5678)

    print("KERNEL_OK")
</pallas_src>

<mosaic_0001>
module attributes {stable_mosaic.version = 11 : i64} {
  func.func @_sampler_kernel(%arg0: i32, %arg1: memref<8x256xf32, #tpu.memory_space<vmem>>, %arg2: memref<8x256xf32, #tpu.memory_space<vmem>>, %arg3: memref<8x128xi32, #tpu.memory_space<vmem>>) attributes {dimension_semantics = [#tpu.dimension_semantics<parallel>], iteration_bounds = array<i64: 1>, scalar_prefetch = 0 : i64, scratch_operands = 0 : i64, tpu.core_type = #tpu.core_type<tc>, window_params = [{transform_indices = @transform_0, window_bounds = array<i64: 8, 256>}, {transform_indices = @transform_1, window_bounds = array<i64: 8, 256>}, {transform_indices = @transform_2, window_bounds = array<i64: 8, 128>}]} {
    %0 = tpu.iota {dimensions = array<i32: 1>} : vector<8x256xi32>
    %1 = tpu.iota {dimensions = array<i32: 1>} : vector<8x128xi32>
    %c0_i32 = arith.constant 0 : i32
    %c1_i32 = arith.constant 1 : i32
    %2 = arith.muli %c0_i32, %c1_i32 : i32
    %c0_i32_0 = arith.constant 0 : i32
    %3 = arith.addi %c0_i32_0, %2 : i32
    %c8_i32 = arith.constant 8 : i32
    %4 = arith.muli %3, %c8_i32 : i32
    %5 = tpu.assume_multiple %4, 8 : i32
    %6 = arith.index_cast %5 : i32 to index
    %c0 = arith.constant 0 : index
    %7 = vector.load %arg1[%6, %c0] : memref<8x256xf32, #tpu.memory_space<vmem>>, vector<8x256xf32>
    %8 = arith.index_cast %5 : i32 to index
    %c0_1 = arith.constant 0 : index
    %9 = vector.load %arg2[%8, %c0_1] : memref<8x256xf32, #tpu.memory_space<vmem>>, vector<8x256xf32>
    %cst = arith.constant 0.000000e+00 : f32
    %10 = vector.broadcast %cst : f32 to vector<8x256xf32>
    %11 = arith.cmpf ogt, %7, %10 : vector<8x256xf32>
    %12 = math.log %7 : vector<8x256xf32>
    %cst_2 = arith.constant 0xFF800000 : f32
    %13 = vector.broadcast %cst_2 : f32 to vector<8x256xf32>
    %14 = arith.select %11, %12, %13 : vector<8x256xi1>, vector<8x256xf32>
    %15 = arith.addf %14, %9 : vector<8x256xf32>
    %c0_i32_3 = arith.constant 0 : i32
    %16 = vector.broadcast %c0_i32_3 : i32 to vector<8x128xi32>
    %c0_i32_4 = arith.constant 0 : i32
    %cst_5 = arith.constant dense<0xFF800000> : vector<8xf32>
    %17 = vector.multi_reduction <maximumf>, %15, %cst_5 [1] : vector<8x256xf32> to vector<8xf32>
    %18 = vector.shape_cast %17 : vector<8xf32> to vector<8x1xf32>
    %19 = vector.broadcast %18 : vector<8x1xf32> to vector<8x256xf32>
    %20 = arith.cmpf oeq, %15, %19 : vector<8x256xf32>
    %c256_i32 = arith.constant 256 : i32
    %21 = vector.broadcast %c256_i32 : i32 to vector<8x256xi32>
    %22 = arith.select %20, %0, %21 : vector<8x256xi1>, vector<8x256xi32>
    %cst_6 = arith.constant dense<2147483647> : vector<8xi32>
    %23 = vector.multi_reduction <minsi>, %22, %cst_6 [1] : vector<8x256xi32> to vector<8xi32>
    %24 = vector.shape_cast %23 : vector<8xi32> to vector<8x1xi32>
    %c255_i32 = arith.constant 255 : i32
    %25 = vector.broadcast %c255_i32 : i32 to vector<8x1xi32>
    %26 = arith.minsi %24, %25 : vector<8x1xi32>
    %27 = vector.broadcast %c0_i32_4 : i32 to vector<8x128xi32>
    %28 = arith.cmpi eq, %1, %27 : vector<8x128xi32>
    %29 = vector.shape_cast %26 : vector<8x1xi32> to vector<8x1xi32>
    %30 = vector.broadcast %29 : vector<8x1xi32> to vector<8x128xi32>
    %31 = arith.select %28, %30, %16 : vector<8x128xi1>, vector<8x128xi32>
    %32 = vector.broadcast %26 : vector<8x1xi32> to vector<8x256xi32>
    %33 = arith.cmpi eq, %0, %32 : vector<8x256xi32>
    %cst_7 = arith.constant 0xFF800000 : f32
    %34 = vector.broadcast %cst_7 : f32 to vector<8x256xf32>
    %35 = arith.select %33, %34, %15 : vector<8x256xi1>, vector<8x256xf32>
    %c1_i32_8 = arith.constant 1 : i32
    %cst_9 = arith.constant dense<0xFF800000> : vector<8xf32>
    %36 = vector.multi_reduction <maximumf>, %35, %cst_9 [1] : vector<8x256xf32> to vector<8xf32>
    %37 = vector.shape_cast %36 : vector<8xf32> to vector<8x1xf32>
    %38 = vector.broadcast %37 : vector<8x1xf32> to vector<8x256xf32>
    %39 = arith.cmpf oeq, %35, %38 : vector<8x256xf32>
    %c256_i32_10 = arith.constant 256 : i32
    %40 = vector.broadcast %c256_i32_10 : i32 to vector<8x256xi32>
    %41 = arith.select %39, %0, %40 : vector<8x256xi1>, vector<8x256xi32>
    %cst_11 = arith.constant dense<2147483647> : vector<8xi32>
    %42 = vector.multi_reduction <minsi>, %41, %cst_11 [1] : vector<8x256xi32> to vector<8xi32>
    %43 = vector.shape_cast %42 : vector<8xi32> to vector<8x1xi32>
    %c255_i32_12 = arith.constant 255 : i32
    %44 = vector.broadcast %c255_i32_12 : i32 to vector<8x1xi32>
    %45 = arith.minsi %43, %44 : vector<8x1xi32>
    %46 = vector.broadcast %c1_i32_8 : i32 to vector<8x128xi32>
    %47 = arith.cmpi eq, %1, %46 : vector<8x128xi32>
    %48 = vector.shape_cast %45 : vector<8x1xi32> to vector<8x1xi32>
    %49 = vector.broadcast %48 : vector<8x1xi32> to vector<8x128xi32>
    %50 = arith.select %47, %49, %31 : vector<8x128xi1>, vector<8x128xi32>
    %51 = vector.broadcast %45 : vector<8x1xi32> to vector<8x256xi32>
    %52 = arith.cmpi eq, %0, %51 : vector<8x256xi32>
    %cst_13 = arith.constant 0xFF800000 : f32
    %53 = vector.broadcast %cst_13 : f32 to vector<8x256xf32>
    %54 = arith.select %52, %53, %35 : vector<8x256xi1>, vector<8x256xf32>
    %c2_i32 = arith.constant 2 : i32
    %cst_14 = arith.constant dense<0xFF800000> : vector<8xf32>
    %55 = vector.multi_reduction <maximumf>, %54, %cst_14 [1] : vector<8x256xf32> to vector<8xf32>
    %56 = vector.shape_cast %55 : vector<8xf32> to vector<8x1xf32>
    %57 = vector.broadcast %56 : vector<8x1xf32> to vector<8x256xf32>
    %58 = arith.cmpf oeq, %54, %57 : vector<8x256xf32>
    %c256_i32_15 = arith.constant 256 : i32
    %59 = vector.broadcast %c256_i32_15 : i32 to vector<8x256xi32>
    %60 = arith.select %58, %0, %59 : vector<8x256xi1>, vector<8x256xi32>
    %cst_16 = arith.constant dense<2147483647> : vector<8xi32>
    %61 = vector.multi_reduction <minsi>, %60, %cst_16 [1] : vector<8x256xi32> to vector<8xi32>
    %62 = vector.shape_cast %61 : vector<8xi32> to vector<8x1xi32>
    %c255_i32_17 = arith.constant 255 : i32
    %63 = vector.broadcast %c255_i32_17 : i32 to vector<8x1xi32>
    %64 = arith.minsi %62, %63 : vector<8x1xi32>
    %65 = vector.broadcast %c2_i32 : i32 to vector<8x128xi32>
    %66 = arith.cmpi eq, %1, %65 : vector<8x128xi32>
    %67 = vector.shape_cast %64 : vector<8x1xi32> to vector<8x1xi32>
    %68 = vector.broadcast %67 : vector<8x1xi32> to vector<8x128xi32>
    %69 = arith.select %66, %68, %50 : vector<8x128xi1>, vector<8x128xi32>
    %70 = vector.broadcast %64 : vector<8x1xi32> to vector<8x256xi32>
    %71 = arith.cmpi eq, %0, %70 : vector<8x256xi32>
    %cst_18 = arith.constant 0xFF800000 : f32
    %72 = vector.broadcast %cst_18 : f32 to vector<8x256xf32>
    %73 = arith.select %71, %72, %54 : vector<8x256xi1>, vector<8x256xf32>
    %c3_i32 = arith.constant 3 : i32
    %cst_19 = arith.constant dense<0xFF800000> : vector<8xf32>
    %74 = vector.multi_reduction <maximumf>, %73, %cst_19 [1] : vector<8x256xf32> to vector<8xf32>
    %75 = vector.shape_cast %74 : vector<8xf32> to vector<8x1xf32>
    %76 = vector.broadcast %75 : vector<8x1xf32> to vector<8x256xf32>
    %77 = arith.cmpf oeq, %73, %76 : vector<8x256xf32>
    %c256_i32_20 = arith.constant 256 : i32
    %78 = vector.broadcast %c256_i32_20 : i32 to vector<8x256xi32>
    %79 = arith.select %77, %0, %78 : vector<8x256xi1>, vector<8x256xi32>
    %cst_21 = arith.constant dense<2147483647> : vector<8xi32>
    %80 = vector.multi_reduction <minsi>, %79, %cst_21 [1] : vector<8x256xi32> to vector<8xi32>
    %81 = vector.shape_cast %80 : vector<8xi32> to vector<8x1xi32>
    %c255_i32_22 = arith.constant 255 : i32
    %82 = vector.broadcast %c255_i32_22 : i32 to vector<8x1xi32>
    %83 = arith.minsi %81, %82 : vector<8x1xi32>
    %84 = vector.broadcast %c3_i32 : i32 to vector<8x128xi32>
    %85 = arith.cmpi eq, %1, %84 : vector<8x128xi32>
    %86 = vector.shape_cast %83 : vector<8x1xi32> to vector<8x1xi32>
    %87 = vector.broadcast %86 : vector<8x1xi32> to vector<8x128xi32>
    %88 = arith.select %85, %87, %69 : vector<8x128xi1>, vector<8x128xi32>
    %89 = vector.broadcast %83 : vector<8x1xi32> to vector<8x256xi32>
    %90 = arith.cmpi eq, %0, %89 : vector<8x256xi32>
    %cst_23 = arith.constant 0xFF800000 : f32
    %91 = vector.broadcast %cst_23 : f32 to vector<8x256xf32>
    %92 = arith.select %90, %91, %73 : vector<8x256xi1>, vector<8x256xf32>
    %c4_i32 = arith.constant 4 : i32
    %cst_24 = arith.constant dense<0xFF800000> : vector<8xf32>
    %93 = vector.multi_reduction <maximumf>, %92, %cst_24 [1] : vector<8x256xf32> to vector<8xf32>
    %94 = vector.shape_cast %93 : vector<8xf32> to vector<8x1xf32>
    %95 = vector.broadcast %94 : vector<8x1xf32> to vector<8x256xf32>
    %96 = arith.cmpf oeq, %92, %95 : vector<8x256xf32>
    %c256_i32_25 = arith.constant 256 : i32
    %97 = vector.broadcast %c256_i32_25 : i32 to vector<8x256xi32>
    %98 = arith.select %96, %0, %97 : vector<8x256xi1>, vector<8x256xi32>
    %cst_26 = arith.constant dense<2147483647> : vector<8xi32>
    %99 = vector.multi_reduction <minsi>, %98, %cst_26 [1] : vector<8x256xi32> to vector<8xi32>
    %100 = vector.shape_cast %99 : vector<8xi32> to vector<8x1xi32>
    %c255_i32_27 = arith.constant 255 : i32
    %101 = vector.broadcast %c255_i32_27 : i32 to vector<8x1xi32>
    %102 = arith.minsi %100, %101 : vector<8x1xi32>
    %103 = vector.broadcast %c4_i32 : i32 to vector<8x128xi32>
    %104 = arith.cmpi eq, %1, %103 : vector<8x128xi32>
    %105 = vector.shape_cast %102 : vector<8x1xi32> to vector<8x1xi32>
    %106 = vector.broadcast %105 : vector<8x1xi32> to vector<8x128xi32>
    %107 = arith.select %104, %106, %88 : vector<8x128xi1>, vector<8x128xi32>
    %108 = vector.broadcast %102 : vector<8x1xi32> to vector<8x256xi32>
    %109 = arith.cmpi eq, %0, %108 : vector<8x256xi32>
    %cst_28 = arith.constant 0xFF800000 : f32
    %110 = vector.broadcast %cst_28 : f32 to vector<8x256xf32>
    %111 = arith.select %109, %110, %92 : vector<8x256xi1>, vector<8x256xf32>
    %c5_i32 = arith.constant 5 : i32
    %cst_29 = arith.constant dense<0xFF800000> : vector<8xf32>
    %112 = vector.multi_reduction <maximumf>, %111, %cst_29 [1] : vector<8x256xf32> to vector<8xf32>
    %113 = vector.shape_cast %112 : vector<8xf32> to vector<8x1xf32>
    %114 = vector.broadcast %113 : vector<8x1xf32> to vector<8x256xf32>
    %115 = arith.cmpf oeq, %111, %114 : vector<8x256xf32>
    %c256_i32_30 = arith.constant 256 : i32
    %116 = vector.broadcast %c256_i32_30 : i32 to vector<8x256xi32>
    %117 = arith.select %115, %0, %116 : vector<8x256xi1>, vector<8x256xi32>
    %cst_31 = arith.constant dense<2147483647> : vector<8xi32>
    %118 = vector.multi_reduction <minsi>, %117, %cst_31 [1] : vector<8x256xi32> to vector<8xi32>
    %119 = vector.shape_cast %118 : vector<8xi32> to vector<8x1xi32>
    %c255_i32_32 = arith.constant 255 : i32
    %120 = vector.broadcast %c255_i32_32 : i32 to vector<8x1xi32>
    %121 = arith.minsi %119, %120 : vector<8x1xi32>
    %122 = vector.broadcast %c5_i32 : i32 to vector<8x128xi32>
    %123 = arith.cmpi eq, %1, %122 : vector<8x128xi32>
    %124 = vector.shape_cast %121 : vector<8x1xi32> to vector<8x1xi32>
    %125 = vector.broadcast %124 : vector<8x1xi32> to vector<8x128xi32>
    %126 = arith.select %123, %125, %107 : vector<8x128xi1>, vector<8x128xi32>
    %127 = vector.broadcast %121 : vector<8x1xi32> to vector<8x256xi32>
    %128 = arith.cmpi eq, %0, %127 : vector<8x256xi32>
    %cst_33 = arith.constant 0xFF800000 : f32
    %129 = vector.broadcast %cst_33 : f32 to vector<8x256xf32>
    %130 = arith.select %128, %129, %111 : vector<8x256xi1>, vector<8x256xf32>
    %c6_i32 = arith.constant 6 : i32
    %cst_34 = arith.constant dense<0xFF800000> : vector<8xf32>
    %131 = vector.multi_reduction <maximumf>, %130, %cst_34 [1] : vector<8x256xf32> to vector<8xf32>
    %132 = vector.shape_cast %131 : vector<8xf32> to vector<8x1xf32>
    %133 = vector.broadcast %132 : vector<8x1xf32> to vector<8x256xf32>
    %134 = arith.cmpf oeq, %130, %133 : vector<8x256xf32>
    %c256_i32_35 = arith.constant 256 : i32
    %135 = vector.broadcast %c256_i32_35 : i32 to vector<8x256xi32>
    %136 = arith.select %134, %0, %135 : vector<8x256xi1>, vector<8x256xi32>
    %cst_36 = arith.constant dense<2147483647> : vector<8xi32>
    %137 = vector.multi_reduction <minsi>, %136, %cst_36 [1] : vector<8x256xi32> to vector<8xi32>
    %138 = vector.shape_cast %137 : vector<8xi32> to vector<8x1xi32>
    %c255_i32_37 = arith.constant 255 : i32
    %139 = vector.broadcast %c255_i32_37 : i32 to vector<8x1xi32>
    %140 = arith.minsi %138, %139 : vector<8x1xi32>
    %141 = vector.broadcast %c6_i32 : i32 to vector<8x128xi32>
    %142 = arith.cmpi eq, %1, %141 : vector<8x128xi32>
    %143 = vector.shape_cast %140 : vector<8x1xi32> to vector<8x1xi32>
    %144 = vector.broadcast %143 : vector<8x1xi32> to vector<8x128xi32>
    %145 = arith.select %142, %144, %126 : vector<8x128xi1>, vector<8x128xi32>
    %146 = vector.broadcast %140 : vector<8x1xi32> to vector<8x256xi32>
    %147 = arith.cmpi eq, %0, %146 : vector<8x256xi32>
    %cst_38 = arith.constant 0xFF800000 : f32
    %148 = vector.broadcast %cst_38 : f32 to vector<8x256xf32>
    %149 = arith.select %147, %148, %130 : vector<8x256xi1>, vector<8x256xf32>
    %c7_i32 = arith.constant 7 : i32
    %cst_39 = arith.constant dense<0xFF800000> : vector<8xf32>
    %150 = vector.multi_reduction <maximumf>, %149, %cst_39 [1] : vector<8x256xf32> to vector<8xf32>
    %151 = vector.shape_cast %150 : vector<8xf32> to vector<8x1xf32>
    %152 = vector.broadcast %151 : vector<8x1xf32> to vector<8x256xf32>
    %153 = arith.cmpf oeq, %149, %152 : vector<8x256xf32>
    %c256_i32_40 = arith.constant 256 : i32
    %154 = vector.broadcast %c256_i32_40 : i32 to vector<8x256xi32>
    %155 = arith.select %153, %0, %154 : vector<8x256xi1>, vector<8x256xi32>
    %cst_41 = arith.constant dense<2147483647> : vector<8xi32>
    %156 = vector.multi_reduction <minsi>, %155, %cst_41 [1] : vector<8x256xi32> to vector<8xi32>
    %157 = vector.shape_cast %156 : vector<8xi32> to vector<8x1xi32>
    %c255_i32_42 = arith.constant 255 : i32
    %158 = vector.broadcast %c255_i32_42 : i32 to vector<8x1xi32>
    %159 = arith.minsi %157, %158 : vector<8x1xi32>
    %160 = vector.broadcast %c7_i32 : i32 to vector<8x128xi32>
    %161 = arith.cmpi eq, %1, %160 : vector<8x128xi32>
    %162 = vector.shape_cast %159 : vector<8x1xi32> to vector<8x1xi32>
    %163 = vector.broadcast %162 : vector<8x1xi32> to vector<8x128xi32>
    %164 = arith.select %161, %163, %145 : vector<8x128xi1>, vector<8x128xi32>
    %165 = vector.broadcast %159 : vector<8x1xi32> to vector<8x256xi32>
    %166 = arith.cmpi eq, %0, %165 : vector<8x256xi32>
    %cst_43 = arith.constant 0xFF800000 : f32
    %167 = vector.broadcast %cst_43 : f32 to vector<8x256xf32>
    %168 = arith.select %166, %167, %149 : vector<8x256xi1>, vector<8x256xf32>
    %c8_i32_44 = arith.constant 8 : i32
    %169 = arith.index_cast %5 : i32 to index
    %c0_45 = arith.constant 0 : index
    %170 = vector.load %arg3[%169, %c0_45] : memref<8x128xi32, #tpu.memory_space<vmem>>, vector<8x128xi32>
    tpu.vector_store %arg3[%169, %c0_45], %164 {strides = array<i32>} : memref<8x128xi32, #tpu.memory_space<vmem>>, vector<8x128xi32>,
    %c1_i32_46 = arith.constant 1 : i32
    return
  }
  func.func @transform_0(%arg0: i32) -> (i32, i32) {
    %c0_i32 = arith.constant 0 : i32
    %c0_i32_0 = arith.constant 0 : i32
    return %arg0, %c0_i32 : i32, i32
  }
  func.func @transform_1(%arg0: i32) -> (i32, i32) {
    %c0_i32 = arith.constant 0 : i32
    %c0_i32_0 = arith.constant 0 : i32
    return %arg0, %c0_i32 : i32, i32
  }
  func.func @transform_2(%arg0: i32) -> (i32, i32) {
    %c0_i32 = arith.constant 0 : i32
    %c0_i32_0 = arith.constant 0 : i32
    return %arg0, %c0_i32 : i32, i32
  }
}

</mosaic_0001>

<llo_original>
// kernel: tpu_custom_call.1
$region0: #{tpu_custom_call.1}
  #allocation0 [shape = 'u32[]', space=smem, size = 0x4, offset = 0x4, fixed_abs, tag = 'smem constant byte address 0x4 - core index']
  #allocation1 [shape = 'u32[72,128]{1,0:T(1,128)}', space=vmem, size = 0x9000, scoped, tag = 'internal scratch']
  %s0 = inlined_call_operand.hbm [shape: f32[4,256], index: 0, kind: input, shape index: {}]
  %s1 = inlined_call_operand.hbm [shape: f32[4,256], index: 1, kind: input, shape index: {}]
  %s2 = inlined_call_operand.hbm [shape: s32[8,128], index: 2, kind: output, shape index: {}]
  %s3 = sld [smem:[#allocation0]]
  $region26: #{tpu_custom_call.1} parent=0
    _
  %s5 = ssub.s32 1, %s3
  %s6 = scalar_select 0, %s5, %s3
  $region1: #{tpu_custom_call.1} parent=0
    #allocation2 [shape = 'u8[8192]{0}', space=vmem, size = 0x2000, scoped, tag = 'input window, operand 0, single buffered']
    #allocation3 [shape = 's32[1]{0}', space=sflag, size = 0x4, scoped, tag = 'scoped memory for tpu_custom_call.1']
    #allocation4 [shape = 's32[1]{0}', space=sflag, size = 0x4, scoped, tag = 'scoped memory for tpu_custom_call.1']
    #allocation5 [shape = 'u8[8192]{0}', space=vmem, size = 0x2000, scoped, tag = 'input window, operand 1, single buffered']
    #allocation6 [shape = 's32[1]{0}', space=sflag, size = 0x4, scoped, tag = 'scoped memory for tpu_custom_call.1']
    #allocation7 [shape = 'u8[4096]{0}', space=vmem, size = 0x1000, scoped, tag = 'output window, operand 0, single buffered']
    %7 = vsyncpa [#allocation3], 0
    %8 = vsyncpa [#allocation6], 0
    %9 = vsyncpa [#allocation4], 0
    // Predicated region
    $region2: #{tpu_custom_call.1} parent=1 // pred_check
      _
    $region3: #{tpu_custom_call.1} parent=1 // pred_check_branch
      %11 = sbr.rel (0) target = $region5
    $region4: #{tpu_custom_call.1} parent=1 // pred_region
      %13 = vsyncadd [#allocation3], 128
      %s14 = sshll.u32 %s0, 4
      %s15 = int_to_ptr.hbm [resolvable:$true] %s14
      %s16 = sshll.u32 [#allocation2], 4
      %s17 = int_to_ptr.vmem [resolvable:$true] %s16
      %22 = dma.hbm_to_vmem [thread:$0]  %s15, 128, %s17, [#allocation3], 128, 128, 8
    $region5: #{tpu_custom_call.1} parent=1 // pred_fallthru
      _
    // Predicated region
    $region6: #{tpu_custom_call.1} parent=1 // pred_check
      _
    $region7: #{tpu_custom_call.1} parent=1 // pred_check_branch
      %24 = sbr.rel (0) target = $region9
    $region8: #{tpu_custom_call.1} parent=1 // pred_region
      %26 = vsyncadd [#allocation6], 128
      %s27 = sshll.u32 %s1, 4
      %s28 = int_to_ptr.hbm [resolvable:$true] %s27
      %s29 = sshll.u32 [#allocation5], 4
      %s30 = int_to_ptr.vmem [resolvable:$true] %s29
      %35 = dma.hbm_to_vmem [thread:$0]  %s28, 128, %s30, [#allocation6], 128, 128, 8
    $region9: #{tpu_custom_call.1} parent=1 // pred_fallthru
      _
    // Predicated region
    $region10: #{tpu_custom_call.1} parent=1 // pred_check
      _
    $region11: #{tpu_custom_call.1} parent=1 // pred_check_branch
      %37 = sbr.rel (0) target = $region13
    $region12: #{tpu_custom_call.1} parent=1 // pred_region
      %39 = dma.done [#allocation3], 256
    $region13: #{tpu_custom_call.1} parent=1 // pred_fallthru
      _
    // Predicated region
    $region14: #{tpu_custom_call.1} parent=1 // pred_check
      _
    $region15: #{tpu_custom_call.1} parent=1 // pred_check_branch
      %41 = sbr.rel (0) target = $region17
    $region16: #{tpu_custom_call.1} parent=1 // pred_region
      %43 = dma.done [#allocation6], 256
    $region17: #{tpu_custom_call.1} parent=1 // pred_fallthru
      _
    %v44 = vlaneseq
    %v45 = vand.u32 %v44, 127
    %v46 = vadd.s32 %v45, 128
    %s47 = smul.u32 0, 2
    %s48 = smul.addr %s47, 4
    %s49 = scalar_lea.vmem [#allocation2], %s48
    %v50 = vld [vmem:[%s49] sm:$0xff]
    %v51 = vld [vmem:[%s49 + $0x8] sm:$0xff]
    %s52 = smul.addr %s47, 4
    %s53 = scalar_lea.vmem [#allocation5], %s52
    %v54 = vld [vmem:[%s53] sm:$0xff]
    %v55 = vld [vmem:[%s53 + $0x8] sm:$0xff]
    %vm56 = vcmp.gt.f32.partialorder %v50, 0.0
    %vm57 = vcmp.gt.f32.partialorder %v51, 0.0
    %v58 = vlog2.pop %v50
    %v59 = vmul.f32 %v58, 0.6931472
    %v60 = vlog2.pop %v51
    %v61 = vmul.f32 %v60, 0.6931472
    %v62 = vsel %vm56, %v59, -inf
    %v63 = vsel %vm57, %v61, -inf
    %v64 = vadd.f32 %v62, %v54
    %v65 = vadd.f32 %v63, %v55
    %68 = vst [vmem:[#allocation1] ss:$2 sm:$0xff] %v64
    %s69 = scalar_lea.vmem [#allocation1], 1
    %70 = vst [vmem:[%s69] ss:$2 sm:$0xff] %v65
    %v71 = vld.sshfl [vmem:[#allocation1] sm:$0xff pattern:$0x75316420]
    %v72 = vld.sshfl [vmem:[#allocation1 + $0x8] sm:$0xff pattern:$0x75316420]
    %v75 = vmax.f32 %v71, %v72
    %76 = vmax.xlane.f32.xlu0 %v75
    %v77 = vpop.xlane.xlu0 %76
    %v80 = vunpack.c.l.s4 839922192
    %v81 = vunpack.c.0.s8 %v80
    %v82 = vperm.slane %v77, %v81
    %v84 = vunpack.c.l.s4 1985246804
    %v85 = vunpack.c.0.s8 %v84
    %v86 = vperm.slane %v77, %v85
    %vm89 = vcmp.eq.f32.partialorder %v64, %v82
    %vm90 = vcmp.eq.f32.partialorder %v65, %v86
    %v91 = vrot.slane %v46, 4
    %vm92 = vcmask 1043456
    %v93 = vsel %vm92, %v45, %v91
    %v94 = vsel %vm92, %v91, %v45
    %v95 = vrot.slane %v94, 4
    %v96 = vsel %vm89, %v93, 256
    %v97 = vsel %vm90, %v95, 256
    %98 = vst [vmem:[#allocation1] ss:$2 sm:$0xff] %v96
    %s99 = scalar_lea.vmem [#allocation1], 1
    %100 = vst [vmem:[%s99] ss:$2 sm:$0xff] %v97
    %v101 = vld.sshfl [vmem:[#allocation1] sm:$0xff pattern:$0x75316420]
    %v102 = vld.sshfl [vmem:[#allocation1 + $0x8] sm:$0xff pattern:$0x75316420]
    %vm103 = vcmp.lt.s32.totalorder %v101, %v102
    %v104 = vsel %vm103, %v101, %v102
    %v105 = vand.u32 %v104, 65535
    %v106 = vshra.s32 %v104, 16
    %v107 = vcvt.s32.f32 %v105
    %v108 = vcvt.s32.f32 %v106
    %109 = vmin.xlane.f32.xlu0 %v108
    %v110 = vpop.xlane.xlu0 %109
    %vm111 = vcmp.eq.f32.partialorder %v108, %v110
    %v112 = vsel %vm111, %v107, inf
    %113 = vmin.xlane.f32.xlu0 %v112
    %v114 = vpop.xlane.xlu0 %113
    %v115 = vcvt.f32.s32 %v114
    %v116 = vcvt.f32.s32 %v110
    %v117 = vshll.u32 %v116, 16
    %v118 = vadd.s32 %v117, %v115
    %vm119 = vcmp.lt.s32.totalorder %v118, 255
    %v120 = vsel %vm119, %v118, 255
    %vm121 = vcmp.eq.s32.totalorder %v45, 0
    %v122 = vsel %vm121, %v120, 0
    %vm123 = vcmp.eq.s32.totalorder %v45, %v120
    %vm124 = vcmp.eq.s32.totalorder %v46, %v120
    %125 = vst [vmem:[#allocation1] ss:$2 sm:$0xff] %v64
    %s126 = scalar_lea.vmem [#allocation1], 1
    %127 = vst [vmem:[%s126] ss:$2 sm:$0xff] %v65
    %v128 = vld.sshfl [vmem:[#allocation1] sm:$0xff pattern:$0x75316420]
    %v129 = vld.sshfl [vmem:[#allocation1 + $0x8] sm:$0xff pattern:$0x75316420]
    %v132 = vsel %vm123, -inf, %v128
    %v133 = vsel %vm124, -inf, %v129
    %v134 = vmax.f32 %v132, %v133
    %135 = vmax.xlane.f32.xlu0 %v134
    %v136 = vpop.xlane.xlu0 %135
    %vm137 = vcmp.eq.f32.partialorder %v132, %v136
    %vm138 = vcmp.eq.f32.partialorder %v133, %v136
    %v139 = vsel %vm137, %v45, 256
    %v140 = vsel %vm138, %v46, 256
    %vm141 = vcmp.lt.s32.totalorder %v139, %v140
    %v142 = vsel %vm141, %v139, %v140
    %v143 = vand.u32 %v142, 65535
    %v144 = vshra.s32 %v142, 16
    %v145 = vcvt.s32.f32 %v143
    %v146 = vcvt.s32.f32 %v144
    %147 = vmin.xlane.f32.xlu0 %v146
    %v148 = vpop.xlane.xlu0 %147
    %vm149 = vcmp.eq.f32.partialorder %v146, %v148
    %v150 = vsel %vm149, %v145, inf
    %151 = vmin.xlane.f32.xlu0 %v150
    %v152 = vpop.xlane.xlu0 %151
    %v153 = vcvt.f32.s32 %v152
    %v154 = vcvt.f32.s32 %v148
    %v155 = vshll.u32 %v154, 16
    %v156 = vadd.s32 %v155, %v153
    %vm157 = vcmp.lt.s32.totalorder %v156, 255
    %v158 = vsel %vm157, %v156, 255
    %vm159 = vcmp.eq.s32.totalorder %v45, 1
    %v160 = vsel %vm159, %v158, %v122
    %vm161 = vcmp.eq.s32.totalorder %v45, %v158
    %vm162 = vcmp.eq.s32.totalorder %v46, %v158
    %v163 = vsel %vm161, -inf, %v132
    %v164 = vsel %vm162, -inf, %v133
    %v165 = vmax.f32 %v163, %v164
    %166 = vmax.xlane.f32.xlu0 %v165
    %v167 = vpop.xlane.xlu0 %166
    %vm168 = vcmp.eq.f32.partialorder %v163, %v167
    %vm169 = vcmp.eq.f32.partialorder %v164, %v167
    %v170 = vsel %vm168, %v45, 256
    %v171 = vsel %vm169, %v46, 256
    %vm172 = vcmp.lt.s32.totalorder %v170, %v171
    %v173 = vsel %vm172, %v170, %v171
    %v174 = vand.u32 %v173, 65535
    %v175 = vshra.s32 %v173, 16
    %v176 = vcvt.s32.f32 %v174
    %v177 = vcvt.s32.f32 %v175
    %178 = vmin.xlane.f32.xlu0 %v177
    %v179 = vpop.xlane.xlu0 %178
    %vm180 = vcmp.eq.f32.partialorder %v177, %v179
    %v181 = vsel %vm180, %v176, inf
    %182 = vmin.xlane.f32.xlu0 %v181
    %v183 = vpop.xlane.xlu0 %182
    %v184 = vcvt.f32.s32 %v183
    %v185 = vcvt.f32.s32 %v179
    %v186 = vshll.u32 %v185, 16
    %v187 = vadd.s32 %v186, %v184
    %vm188 = vcmp.lt.s32.totalorder %v187, 255
    %v189 = vsel %vm188, %v187, 255
    %vm190 = vcmp.eq.s32.totalorder %v45, 2
    %v191 = vsel %vm190, %v189, %v160
    %vm192 = vcmp.eq.s32.totalorder %v45, %v189
    %vm193 = vcmp.eq.s32.totalorder %v46, %v189
    %v194 = vsel %vm192, -inf, %v163
    %v195 = vsel %vm193, -inf, %v164
    %v196 = vmax.f32 %v194, %v195
    %197 = vmax.xlane.f32.xlu0 %v196
    %v198 = vpop.xlane.xlu0 %197
    %vm199 = vcmp.eq.f32.partialorder %v194, %v198
    %vm200 = vcmp.eq.f32.partialorder %v195, %v198
    %v201 = vsel %vm199, %v45, 256
    %v202 = vsel %vm200, %v46, 256
    %vm203 = vcmp.lt.s32.totalorder %v201, %v202
    %v204 = vsel %vm203, %v201, %v202
    %v205 = vand.u32 %v204, 65535
    %v206 = vshra.s32 %v204, 16
    %v207 = vcvt.s32.f32 %v205
    %v208 = vcvt.s32.f32 %v206
    %209 = vmin.xlane.f32.xlu0 %v208
    %v210 = vpop.xlane.xlu0 %209
    %vm211 = vcmp.eq.f32.partialorder %v208, %v210
    %v212 = vsel %vm211, %v207, inf
    %213 = vmin.xlane.f32.xlu0 %v212
    %v214 = vpop.xlane.xlu0 %213
    %v215 = vcvt.f32.s32 %v214
    %v216 = vcvt.f32.s32 %v210
    %v217 = vshll.u32 %v216, 16
    %v218 = vadd.s32 %v217, %v215
    %vm219 = vcmp.lt.s32.totalorder %v218, 255
    %v220 = vsel %vm219, %v218, 255
    %vm221 = vcmp.eq.s32.totalorder %v45, 3
    %v222 = vsel %vm221, %v220, %v191
    %vm223 = vcmp.eq.s32.totalorder %v45, %v220
    %vm224 = vcmp.eq.s32.totalorder %v46, %v220
    %v225 = vsel %vm223, -inf, %v194
    %v226 = vsel %vm224, -inf, %v195
    %v227 = vmax.f32 %v225, %v226
    %228 = vmax.xlane.f32.xlu0 %v227
    %v229 = vpop.xlane.xlu0 %228
    %vm230 = vcmp.eq.f32.partialorder %v225, %v229
    %vm231 = vcmp.eq.f32.partialorder %v226, %v229
    %v232 = vsel %vm230, %v45, 256
    %v233 = vsel %vm231, %v46, 256
    %vm234 = vcmp.lt.s32.totalorder %v232, %v233
    %v235 = vsel %vm234, %v232, %v233
    %v236 = vand.u32 %v235, 65535
    %v237 = vshra.s32 %v235, 16
    %v238 = vcvt.s32.f32 %v236
    %v239 = vcvt.s32.f32 %v237
    %240 = vmin.xlane.f32.xlu0 %v239
    %v241 = vpop.xlane.xlu0 %240
    %vm242 = vcmp.eq.f32.partialorder %v239, %v241
    %v243 = vsel %vm242, %v238, inf
    %244 = vmin.xlane.f32.xlu0 %v243
    %v245 = vpop.xlane.xlu0 %244
    %v246 = vcvt.f32.s32 %v245
    %v247 = vcvt.f32.s32 %v241
    %v248 = vshll.u32 %v247, 16
    %v249 = vadd.s32 %v248, %v246
    %vm250 = vcmp.lt.s32.totalorder %v249, 255
    %v251 = vsel %vm250, %v249, 255
    %vm252 = vcmp.eq.s32.totalorder %v45, 4
    %v253 = vsel %vm252, %v251, %v222
    %vm254 = vcmp.eq.s32.totalorder %v45, %v251
    %vm255 = vcmp.eq.s32.totalorder %v46, %v251
    %v256 = vsel %vm254, -inf, %v225
    %v257 = vsel %vm255, -inf, %v226
    %v258 = vmax.f32 %v256, %v257
    %259 = vmax.xlane.f32.xlu0 %v258
    %v260 = vpop.xlane.xlu0 %259
    %vm261 = vcmp.eq.f32.partialorder %v256, %v260
    %vm262 = vcmp.eq.f32.partialorder %v257, %v260
    %v263 = vsel %vm261, %v45, 256
    %v264 = vsel %vm262, %v46, 256
    %vm265 = vcmp.lt.s32.totalorder %v263, %v264
    %v266 = vsel %vm265, %v263, %v264
    %v267 = vand.u32 %v266, 65535
    %v268 = vshra.s32 %v266, 16
    %v269 = vcvt.s32.f32 %v267
    %v270 = vcvt.s32.f32 %v268
    %271 = vmin.xlane.f32.xlu0 %v270
    %v272 = vpop.xlane.xlu0 %271
    %vm273 = vcmp.eq.f32.partialorder %v270, %v272
    %v274 = vsel %vm273, %v269, inf
    %275 = vmin.xlane.f32.xlu0 %v274
    %v276 = vpop.xlane.xlu0 %275
    %v277 = vcvt.f32.s32 %v276
    %v278 = vcvt.f32.s32 %v272
    %v279 = vshll.u32 %v278, 16
    %v280 = vadd.s32 %v279, %v277
    %vm281 = vcmp.lt.s32.totalorder %v280, 255
    %v282 = vsel %vm281, %v280, 255
    %vm283 = vcmp.eq.s32.totalorder %v45, 5
    %v284 = vsel %vm283, %v282, %v253
    %vm285 = vcmp.eq.s32.totalorder %v45, %v282
    %vm286 = vcmp.eq.s32.totalorder %v46, %v282
    %v287 = vsel %vm285, -inf, %v256
    %v288 = vsel %vm286, -inf, %v257
    %v289 = vmax.f32 %v287, %v288
    %290 = vmax.xlane.f32.xlu0 %v289
    %v291 = vpop.xlane.xlu0 %290
    %vm292 = vcmp.eq.f32.partialorder %v287, %v291
    %vm293 = vcmp.eq.f32.partialorder %v288, %v291
    %v294 = vsel %vm292, %v45, 256
    %v295 = vsel %vm293, %v46, 256
    %vm296 = vcmp.lt.s32.totalorder %v294, %v295
    %v297 = vsel %vm296, %v294, %v295
    %v298 = vand.u32 %v297, 65535
    %v299 = vshra.s32 %v297, 16
    %v300 = vcvt.s32.f32 %v298
    %v301 = vcvt.s32.f32 %v299
    %302 = vmin.xlane.f32.xlu0 %v301
    %v303 = vpop.xlane.xlu0 %302
    %vm304 = vcmp.eq.f32.partialorder %v301, %v303
    %v305 = vsel %vm304, %v300, inf
    %306 = vmin.xlane.f32.xlu0 %v305
    %v307 = vpop.xlane.xlu0 %306
    %v308 = vcvt.f32.s32 %v307
    %v309 = vcvt.f32.s32 %v303
    %v310 = vshll.u32 %v309, 16
    %v311 = vadd.s32 %v310, %v308
    %vm312 = vcmp.lt.s32.totalorder %v311, 255
    %v313 = vsel %vm312, %v311, 255
    %vm314 = vcmp.eq.s32.totalorder %v45, 6
    %v315 = vsel %vm314, %v313, %v284
    %vm316 = vcmp.eq.s32.totalorder %v45, %v313
    %vm317 = vcmp.eq.s32.totalorder %v46, %v313
    %v318 = vsel %vm316, -inf, %v287
    %v319 = vsel %vm317, -inf, %v288
    %v320 = vmax.f32 %v318, %v319
    %321 = vmax.xlane.f32.xlu0 %v320
    %v322 = vpop.xlane.xlu0 %321
    %vm323 = vcmp.eq.f32.partialorder %v318, %v322
    %vm324 = vcmp.eq.f32.partialorder %v319, %v322
    %v325 = vsel %vm323, %v45, 256
    %v326 = vsel %vm324, %v46, 256
    %vm327 = vcmp.lt.s32.totalorder %v325, %v326
    %v328 = vsel %vm327, %v325, %v326
    %v329 = vand.u32 %v328, 65535
    %v330 = vshra.s32 %v328, 16
    %v331 = vcvt.s32.f32 %v329
    %v332 = vcvt.s32.f32 %v330
    %333 = vmin.xlane.f32.xlu0 %v332
    %v334 = vpop.xlane.xlu0 %333
    %vm335 = vcmp.eq.f32.partialorder %v332, %v334
    %v336 = vsel %vm335, %v331, inf
    %337 = vmin.xlane.f32.xlu0 %v336
    %v338 = vpop.xlane.xlu0 %337
    %v339 = vcvt.f32.s32 %v338
    %v340 = vcvt.f32.s32 %v334
    %v341 = vshll.u32 %v340, 16
    %v342 = vadd.s32 %v341, %v339
    %vm343 = vcmp.lt.s32.totalorder %v342, 255
    %v344 = vsel %vm343, %v342, 255
    %vm345 = vcmp.eq.s32.totalorder %v45, 7
    %v346 = vsel %vm345, %v344, %v315
    %347 = vst [vmem:[#allocation7] sm:$0xff] %v346
    // Predicated region
    $region18: #{tpu_custom_call.1} parent=1 // pred_check
      _
    $region19: #{tpu_custom_call.1} parent=1 // pred_check_branch
      %349 = sbr.rel (0) target = $region21
    $region20: #{tpu_custom_call.1} parent=1 // pred_region
      %351 = vsyncadd [#allocation4], 0
      %s353 = sshll.u32 [#allocation7], 4
      %s354 = int_to_ptr.vmem [resolvable:$true] %s353
      %s355 = sshll.u32 %s2, 4
      %s356 = int_to_ptr.hbm [resolvable:$true] %s355
      %358 = dma.vmem_to_hbm [thread:$0]  %s354, 128, %s356, [#allocation4]
    $region21: #{tpu_custom_call.1} parent=1 // pred_fallthru
      _
    // Predicated region
    $region22: #{tpu_custom_call.1} parent=1 // pred_check
      _
    $region23: #{tpu_custom_call.1} parent=1 // pred_check_branch
      %360 = sbr.rel (0) target = $region25
    $region24: #{tpu_custom_call.1} parent=1 // pred_region
      %362 = dma.done [#allocation4], 128
    $region25: #{tpu_custom_call.1} parent=1 // pred_fallthru
      _
    %363 = vsyncpa [#allocation3], 1
    %364 = vsyncpa [#allocation6], 1
    %365 = vsyncpa [#allocation4], 1

</llo_original>
